<compile_context>
chip_gen: v7x
topology: tpu7x:2x2x1
jax: 0.10.0
libtpu: 0.0.40
codegen_flags: <defaults>
</compile_context>

<pallas_src>
import functools
import math

import jax
import jax.numpy as jnp
from jax import lax
from jax.experimental import pallas as pl
from jax.experimental.pallas import tpu as pltpu


def _cdiv(a: int, b: int) -> int:
    return -(-a // b)


def _pe_kernel(tok_ref, scale_ref, phase_ref, out_ref, *, k: int, use_mxu: bool):
    """angle[r, :] = sum_j pos[r, j] * scale[j, :] + phase ;  out = sin(angle).

    tok_ref:   (TR, KW)  int32  -- k (zero-padded to KW) token indices per row
    scale_ref: (KW, C)   f32    -- block-diagonal: row j holds 1/denom in lane
                                   group j (C = k*E), zero elsewhere
    phase_ref: (1, C)    f32    -- 0 for even (sin) cols, pi/2 for odd (cos) cols
    out_ref:   (TR, C)   f32
    """
    pos = tok_ref[...].astype(jnp.float32)
    phase = phase_ref[...]
    if use_mxu:
        # One f32 matmul on the otherwise-idle MXU replaces k VALU FMAs per
        # element.  HIGHEST precision keeps full f32 mantissa (bf16 truncation
        # would corrupt the angle for positions >= 256).
        angle = lax.dot_general(
            pos, scale_ref[...],
            dimension_numbers=(((1,), (0,)), ((), ())),
            preferred_element_type=jnp.float32,
            precision=lax.Precision.HIGHEST,
        ) + phase
    else:
        # Tiny / unaligned blocks: k static FMAs (exact lane-group broadcast).
        scale = scale_ref[...]
        angle = phase
        for j in range(k):
            angle = angle + pos[:, j:j + 1] * scale[j:j + 1, :]
    out_ref[...] = jnp.sin(angle)          # cos(x) == sin(x + pi/2)


def positional_encoding_forward(tok: jax.Array, emb_size: int, max_len: int) -> jax.Array:
    """tok: (B, S) integer indices in [0, max_len). Returns (B, S, emb_size) f32."""
    assert emb_size % 2 == 0, "embSize must be even (as in the torch module)"
    B, S = tok.shape
    rows = B * S

    # ---- lane packing: make the output last dim a multiple of 128 ----
    k = 1
    if emb_size % 128 != 0:
        kk = math.lcm(emb_size, 128) // emb_size
        if kk <= 64:                        # always true for even emb_size
            k = kk
    packed_cols = k * emb_size
    packed_rows = _cdiv(rows, k)
    pad_elems = packed_rows * k - rows      # 0 whenever k divides B*S (common case)

    # ---- per-generation VMEM budget ----
    try:
        vmem_cap = getattr(pltpu.get_tpu_info(), "vmem_capacity_bytes", 64 * 2**20)
    except Exception:                       # conservative (v7x-safe) default
        vmem_cap = 64 * 2**20
    if vmem_cap >= 100 * 2**20:             # v5e / v6e: 128 MiB physical VMEM
        max_block_bytes = 16 * 2**20
        vmem_limit = 64 * 2**20
    else:                                   # v7x: 64 MiB per TensorCore
        max_block_bytes = 8 * 2**20
        vmem_limit = 32 * 2**20

    # ---- tile selection: fill the byte budget, keep >= 2 grid steps ----
    row_bytes = packed_cols * 4
    tile_rows = max(8, (max_block_bytes // row_bytes) // 8 * 8)
    if packed_rows >= 16:
        half = _cdiv(_cdiv(packed_rows, 2), 8) * 8   # >= 2 steps: both v7x TCs busy
        tile_rows = min(tile_rows, half)
    if tile_rows > packed_rows:
        tile_rows = packed_rows             # tiny input: one full-extent block
    grid_steps = _cdiv(packed_rows, tile_rows)       # clipped final block, no padding

    use_mxu = (k > 1) and (tile_rows % 8 == 0)
    kw = 8 if (use_mxu and k < 8) else k    # pad contraction dim to a full sublane tile

    # ---- trace-time constants (hoisted out of the kernel) ----
    half_idx = jnp.arange(0, emb_size, 2, dtype=jnp.float32)
    inv_denom = 1.0 / jnp.exp(half_idx * (jnp.log(jnp.float32(10000.0)) / emb_size))
    inv_denom = jnp.repeat(inv_denom, 2)                                   # (E,)
    phase_one = jnp.tile(jnp.array([0.0, math.pi / 2], jnp.float32), emb_size // 2)
    scale = jnp.kron(jnp.eye(k, dtype=jnp.float32), inv_denom[None, :])    # (k, k*E)
    if kw > k:
        scale = jnp.pad(scale, ((0, kw - k), (0, 0)))                      # (kw, k*E)
    phase = jnp.tile(phase_one, k)[None, :]                                # (1, k*E)

    # ---- pack token indices (input-side only; tiny) ----
    tok_flat = jnp.clip(tok.reshape(-1).astype(jnp.int32), 0, max_len - 1)
    if pad_elems:
        tok_flat = jnp.pad(tok_flat, (0, pad_elems))
    tok_packed = tok_flat.reshape(packed_rows, k)
    if kw > k:
        tok_packed = jnp.pad(tok_packed, ((0, 0), (0, kw - k)))

    out_packed = pl.pallas_call(
        functools.partial(_pe_kernel, k=k, use_mxu=use_mxu),
        out_shape=jax.ShapeDtypeStruct((packed_rows, packed_cols), jnp.float32),
        grid_spec=pltpu.PrefetchScalarGridSpec(
            num_scalar_prefetch=0,
            grid=(grid_steps,),
            in_specs=[
                pl.BlockSpec((tile_rows, kw), lambda i: (i, 0)),
                pl.BlockSpec((kw, packed_cols), lambda i: (0, 0)),   # resident constant
                pl.BlockSpec((1, packed_cols), lambda i: (0, 0)),    # resident constant
            ],
            out_specs=pl.BlockSpec((tile_rows, packed_cols), lambda i: (i, 0)),
        ),
        compiler_params=pltpu.CompilerParams(
            dimension_semantics=("parallel",),
            vmem_limit_bytes=vmem_limit,
        ),
    )(tok_packed, scale, phase)

    # (packed_rows, k*E) is row-major contiguous with (packed_rows*k, E): when k
    # divides B*S this reshape is metadata-only (no extra HBM traffic, no slice).
    out = out_packed.reshape(packed_rows * k, emb_size)
    if pad_elems:
        out = out[:rows]
    return out.reshape(B, S, emb_size)


if __name__ == "__main__":
    key = jax.random.PRNGKey(0)
    B, S = 2, 8
    emb_size, max_len = 32, 64

    tok = jax.random.randint(key, (B, S), 0, max_len, dtype=jnp.int32)

    out = positional_encoding_forward(tok, emb_size, max_len)
    out = jax.block_until_ready(out)

    # Pure-JAX reference mirroring the torch module exactly (table + gather).
    i2 = jnp.arange(0, emb_size, 2).astype(jnp.float32)
    denom = jnp.exp(i2 * jnp.log(jnp.float32(10000.0)) / emb_size)
    pos = jnp.arange(max_len, dtype=jnp.float32).reshape(max_len, 1)
    pe = jnp.zeros((max_len, emb_size), jnp.float32)
    pe = pe.at[:, 0::2].set(jnp.sin(pos / denom))
    pe = pe.at[:, 1::2].set(jnp.cos(pos / denom))
    ref = pe[tok]                                   # (B, S, emb_size)

    assert out.shape == (B, S, emb_size), out.shape
    assert out.dtype == jnp.float32, out.dtype
    # cos(x) = sin(x + pi/2) + fused inv_denom introduce ~1e-5 f32 rounding vs
    # the torch table formulation; 1e-4 is comfortably tight for f32 trig.
    err = float(jnp.max(jnp.abs(out - ref)))
    assert err < 1e-4, f"kernel output mismatch vs reference (max abs err {err})"

    print("KERNEL_OK")
</pallas_src>

<mosaic_0001>
module attributes {stable_mosaic.version = 11 : i64} {
  func.func @_pe_kernel(%arg0: i32, %arg1: memref<4x4xi32, #tpu.memory_space<vmem>>, %arg2: memref<4x128xf32, #tpu.memory_space<vmem>>, %arg3: memref<1x128xf32, #tpu.memory_space<vmem>>, %arg4: memref<4x128xf32, #tpu.memory_space<vmem>>) attributes {dimension_semantics = [#tpu.dimension_semantics<parallel>], iteration_bounds = array<i64: 1>, scalar_prefetch = 0 : i64, scratch_operands = 0 : i64, tpu.core_type = #tpu.core_type<tc>, window_params = [{transform_indices = @transform_0, window_bounds = array<i64: 4, 4>}, {pipeline_mode = #tpu.pipeline_mode<synchronous>, transform_indices = @transform_1, window_bounds = array<i64: 4, 128>}, {pipeline_mode = #tpu.pipeline_mode<synchronous>, transform_indices = @transform_2, window_bounds = array<i64: 1, 128>}, {transform_indices = @transform_3, window_bounds = array<i64: 4, 128>}]} {
    %c0 = arith.constant 0 : index
    %c0_0 = arith.constant 0 : index
    %0 = vector.load %arg1[%c0, %c0_0] : memref<4x4xi32, #tpu.memory_space<vmem>>, vector<4x4xi32>
    %1 = arith.sitofp %0 : vector<4x4xi32> to vector<4x4xf32>
    %c0_1 = arith.constant 0 : index
    %c0_2 = arith.constant 0 : index
    %2 = vector.load %arg3[%c0_1, %c0_2] : memref<1x128xf32, #tpu.memory_space<vmem>>, vector<1x128xf32>
    %c0_3 = arith.constant 0 : index
    %c0_4 = arith.constant 0 : index
    %3 = vector.load %arg2[%c0_3, %c0_4] : memref<4x128xf32, #tpu.memory_space<vmem>>, vector<4x128xf32>
    %4 = vector.extract_strided_slice %1 {offsets = [0, 0], sizes = [4, 1], strides = [1, 1]} : vector<4x4xf32> to vector<4x1xf32>
    %5 = vector.extract_strided_slice %3 {offsets = [0, 0], sizes = [1, 128], strides = [1, 1]} : vector<4x128xf32> to vector<1x128xf32>
    %6 = vector.broadcast %4 : vector<4x1xf32> to vector<4x128xf32>
    %7 = vector.broadcast %5 : vector<1x128xf32> to vector<4x128xf32>
    %8 = arith.mulf %6, %7 : vector<4x128xf32>
    %9 = vector.broadcast %2 : vector<1x128xf32> to vector<4x128xf32>
    %10 = arith.addf %9, %8 : vector<4x128xf32>
    %11 = vector.extract_strided_slice %1 {offsets = [0, 1], sizes = [4, 1], strides = [1, 1]} : vector<4x4xf32> to vector<4x1xf32>
    %12 = vector.extract_strided_slice %3 {offsets = [1, 0], sizes = [1, 128], strides = [1, 1]} : vector<4x128xf32> to vector<1x128xf32>
    %13 = vector.broadcast %11 : vector<4x1xf32> to vector<4x128xf32>
    %14 = vector.broadcast %12 : vector<1x128xf32> to vector<4x128xf32>
    %15 = arith.mulf %13, %14 : vector<4x128xf32>
    %16 = arith.addf %10, %15 : vector<4x128xf32>
    %17 = vector.extract_strided_slice %1 {offsets = [0, 2], sizes = [4, 1], strides = [1, 1]} : vector<4x4xf32> to vector<4x1xf32>
    %18 = vector.extract_strided_slice %3 {offsets = [2, 0], sizes = [1, 128], strides = [1, 1]} : vector<4x128xf32> to vector<1x128xf32>
    %19 = vector.broadcast %17 : vector<4x1xf32> to vector<4x128xf32>
    %20 = vector.broadcast %18 : vector<1x128xf32> to vector<4x128xf32>
    %21 = arith.mulf %19, %20 : vector<4x128xf32>
    %22 = arith.addf %16, %21 : vector<4x128xf32>
    %23 = vector.extract_strided_slice %1 {offsets = [0, 3], sizes = [4, 1], strides = [1, 1]} : vector<4x4xf32> to vector<4x1xf32>
    %24 = vector.extract_strided_slice %3 {offsets = [3, 0], sizes = [1, 128], strides = [1, 1]} : vector<4x128xf32> to vector<1x128xf32>
    %25 = vector.broadcast %23 : vector<4x1xf32> to vector<4x128xf32>
    %26 = vector.broadcast %24 : vector<1x128xf32> to vector<4x128xf32>
    %27 = arith.mulf %25, %26 : vector<4x128xf32>
    %28 = arith.addf %22, %27 : vector<4x128xf32>
    %29 = math.sin %28 : vector<4x128xf32>
    %c0_5 = arith.constant 0 : index
    %c0_6 = arith.constant 0 : index
    %30 = vector.load %arg4[%c0_5, %c0_6] : memref<4x128xf32, #tpu.memory_space<vmem>>, vector<4x128xf32>
    tpu.vector_store %arg4[%c0_5, %c0_6], %29 {strides = array<i32>} : memref<4x128xf32, #tpu.memory_space<vmem>>, vector<4x128xf32>,
    return
  }
  func.func @transform_0(%arg0: i32) -> (i32, i32) {
    %c0_i32 = arith.constant 0 : i32
    %c0_i32_0 = arith.constant 0 : i32
    return %arg0, %c0_i32 : i32, i32
  }
  func.func @transform_1(%arg0: i32) -> (i32, i32) {
    %c0_i32 = arith.constant 0 : i32
    %c0_i32_0 = arith.constant 0 : i32
    %c0_i32_1 = arith.constant 0 : i32
    return %c0_i32, %c0_i32_0 : i32, i32
  }
  func.func @transform_2(%arg0: i32) -> (i32, i32) {
    %c0_i32 = arith.constant 0 : i32
    %c0_i32_0 = arith.constant 0 : i32
    %c0_i32_1 = arith.constant 0 : i32
    return %c0_i32, %c0_i32_0 : i32, i32
  }
  func.func @transform_3(%arg0: i32) -> (i32, i32) {
    %c0_i32 = arith.constant 0 : i32
    %c0_i32_0 = arith.constant 0 : i32
    return %arg0, %c0_i32 : i32, i32
  }
}

</mosaic_0001>

<llo_original>
// kernel: tpu_custom_call.1
$region0: #{tpu_custom_call.1}
  #allocation0 [shape = 'u32[]', space=smem, size = 0x4, offset = 0x4, fixed_abs, tag = 'smem constant byte address 0x4 - core index']
  #allocation1 [shape = 'u32[144,128]{1,0:T(1,128)}', space=vmem, size = 0x12000, scoped, tag = 'internal scratch']
  %s0 = inlined_call_operand.hbm [shape: s32[4,4], index: 0, kind: input, shape index: {}]
  %s1 = inlined_call_operand.hbm [shape: f32[4,128], index: 1, kind: input, shape index: {}]
  %s2 = inlined_call_operand.vmem [shape: f32[1,128], index: 2, kind: input, shape index: {}]
  %s3 = inlined_call_operand.hbm [shape: f32[4,128], index: 3, kind: output, shape index: {}]
  %s4 = sld [smem:[#allocation0]]
  $region30: #{tpu_custom_call.1} parent=0
    _
  %s6 = ssub.s32 1, %s4
  %s7 = scalar_select 0, %s6, %s4
  $region1: #{tpu_custom_call.1} parent=0
    #allocation2 [shape = 'u8[2048]{0}', space=vmem, size = 0x800, scoped, tag = 'input window, operand 0, single buffered']
    #allocation3 [shape = 's32[1]{0}', space=sflag, size = 0x4, scoped, tag = 'scoped memory for tpu_custom_call.1']
    #allocation4 [shape = 's32[1]{0}', space=sflag, size = 0x4, scoped, tag = 'scoped memory for tpu_custom_call.1']
    #allocation5 [shape = 'u8[2048]{0}', space=vmem, size = 0x800, scoped, tag = 'input window, operand 1, single buffered']
    #allocation6 [shape = 's32[1]{0}', space=sflag, size = 0x4, scoped, tag = 'scoped memory for tpu_custom_call.1']
    #allocation7 [shape = 'u8[2048]{0}', space=vmem, size = 0x800, scoped, tag = 'output window, operand 0, single buffered']
    %8 = vsyncpa [#allocation3], 0
    %9 = vsyncpa [#allocation6], 0
    %10 = vsyncpa [#allocation4], 0
    // Predicated region
    $region2: #{tpu_custom_call.1} parent=1 // pred_check
      _
    $region3: #{tpu_custom_call.1} parent=1 // pred_check_branch
      %12 = sbr.rel (0) target = $region5
    $region4: #{tpu_custom_call.1} parent=1 // pred_region
      %s14 = ssub.s32 64, 64
      %15 = vsyncadd [#allocation3], %s14
      %s17 = sshll.u32 [#allocation2], 4
      %s18 = int_to_ptr.vmem [resolvable:$true] %s17
      %20 = dma.hbm_to_vmem [thread:$0]  %s0, 64, %s18, [#allocation3]
    $region5: #{tpu_custom_call.1} parent=1 // pred_fallthru
      _
    // Predicated region
    $region6: #{tpu_custom_call.1} parent=1 // pred_check
      _
    $region7: #{tpu_custom_call.1} parent=1 // pred_check_branch
      %22 = sbr.rel (0) target = $region9
    $region8: #{tpu_custom_call.1} parent=1 // pred_region
      %s24 = ssub.s32 64, 64
      %25 = vsyncadd [#allocation6], %s24
      %s27 = sshll.u32 [#allocation5], 4
      %s28 = int_to_ptr.vmem [resolvable:$true] %s27
      %30 = dma.hbm_to_vmem [thread:$0]  %s1, 64, %s28, [#allocation6]
    $region9: #{tpu_custom_call.1} parent=1 // pred_fallthru
      _
    // Predicated region
    $region10: #{tpu_custom_call.1} parent=1 // pred_check
      _
    $region11: #{tpu_custom_call.1} parent=1 // pred_check_branch
      %32 = sbr.rel (0) target = $region13
    $region12: #{tpu_custom_call.1} parent=1 // pred_region
      _
    $region13: #{tpu_custom_call.1} parent=1 // pred_fallthru
      _
    // Predicated region
    $region14: #{tpu_custom_call.1} parent=1 // pred_check
      _
    $region15: #{tpu_custom_call.1} parent=1 // pred_check_branch
      %34 = sbr.rel (0) target = $region17
    $region16: #{tpu_custom_call.1} parent=1 // pred_region
      %35 = dma.done [#allocation3], 64
    $region17: #{tpu_custom_call.1} parent=1 // pred_fallthru
      _
    // Predicated region
    $region18: #{tpu_custom_call.1} parent=1 // pred_check
      _
    $region19: #{tpu_custom_call.1} parent=1 // pred_check_branch
      %37 = sbr.rel (0) target = $region21
    $region20: #{tpu_custom_call.1} parent=1 // pred_region
      %38 = dma.done [#allocation6], 64
    $region21: #{tpu_custom_call.1} parent=1 // pred_fallthru
      _
    %v39 = vld [vmem:[#allocation2] sm:$0xf]
    %v40 = vcvt.s32.f32 %v39
    %v41 = vld [vmem:[%s2] sm:$0x1]
    %v42 = vld [vmem:[#allocation5] sm:$0xf]
    %44 = vset.pattern.permute.xlu0 0
    %45 = vperm.xlu0 %44, %v40
    %v46 = vpop.permute.xlu0 %45
    %v48 = vlaneseq
    %v49 = vshrl.u32 %v48, 7
    %v50 = vsub.s32 0, %v49
    %v51 = vrot.slane %v42, %v50
    %v52 = vmul.f32 %v46, %v51
    %v54 = vlaneseq
    %v55 = vshrl.u32 %v54, 7
    %v56 = vsub.s32 0, %v55
    %v57 = vrot.slane %v41, %v56
    %v59 = vadd.f32 %v57, %v52
    %60 = vset.pattern.permute.xlu0 1
    %61 = vperm.xlu0 %60, %v40
    %v62 = vpop.permute.xlu0 %61
    %v64 = vlaneseq
    %v65 = vshrl.u32 %v64, 7
    %v66 = vsub.s32 1, %v65
    %v67 = vrot.slane %v42, %v66
    %v68 = vmul.f32 %v62, %v67
    %v69 = vadd.f32 %v59, %v68
    %70 = vset.pattern.permute.xlu0 2
    %71 = vperm.xlu0 %70, %v40
    %v72 = vpop.permute.xlu0 %71
    %v74 = vlaneseq
    %v75 = vshrl.u32 %v74, 7
    %v76 = vsub.s32 2, %v75
    %v77 = vrot.slane %v42, %v76
    %v78 = vmul.f32 %v72, %v77
    %v79 = vadd.f32 %v69, %v78
    %80 = vset.pattern.permute.xlu0 3
    %81 = vperm.xlu0 %80, %v40
    %v82 = vpop.permute.xlu0 %81
    %v84 = vlaneseq
    %v85 = vshrl.u32 %v84, 7
    %v86 = vsub.s32 3, %v85
    %v87 = vrot.slane %v42, %v86
    %v88 = vmul.f32 %v82, %v87
    %v89 = vadd.f32 %v79, %v88
    %v90 = vand.u32 2147483647, %v89
    %vm91 = vcmp.le.f32.partialorder %v90, 0.7853982
    %vm92 = vcmp.lt.s32.totalorder %v89, 0
    %v93 = vand.u32 %v89, 2139095040
    %v94 = vshrl.u32 %v93, 23
    %v95 = vsub.s32 %v94, 127
    %v96 = vand.u32 2147483647, %v89
    %v97 = vand.u32 %v96, 8388607
    %v98 = vor.u32 %v97, 8388608
    %v99 = vsub.s32 0, %v98
    %v100 = vadd.s32 %v95, 1
    %vm101 = vcmp.gt.s32.totalorder %v100, 0
    %v102 = vsel %vm101, %v100, 0
    %v103 = vshrl.u32 %v102, 5
    %v104 = vand.u32 %v102, 31
    %v105 = vsub.s32 32, %v104
    %v106 = vshrl.u32 683565275, %v105
    %v107 = vshll.u32 683565275, %v104
    %v108 = vshrl.u32 2475754826, %v105
    %v109 = vor.u32 %v107, %v108
    %v110 = vshll.u32 2475754826, %v104
    %v111 = vshrl.u32 2131351028, %v105
    %v112 = vor.u32 %v110, %v111
    %v113 = vshll.u32 2131351028, %v104
    %v114 = vshrl.u32 2102212464, %v105
    %v115 = vor.u32 %v113, %v114
    %v116 = vshll.u32 2102212464, %v104
    %v117 = vshrl.u32 920167782, %v105
    %v118 = vor.u32 %v116, %v117
    %v119 = vshll.u32 920167782, %v104
    %v120 = vshrl.u32 1326507024, %v105
    %v121 = vor.u32 %v119, %v120
    %vm122 = vcmp.lt.s32.totalorder %v103, 1
    %vm123 = vcmp.lt.s32.totalorder %v103, 2
    %vm124 = vcmp.lt.s32.totalorder %v103, 3
    %vm125 = vcmp.lt.s32.totalorder %v103, 4
    %v126 = vsel %vm122, %v106, %v109
    %v127 = vsel %vm125, %v115, 2102212464
    %v128 = vsel %vm124, %v112, %v127
    %v129 = vsel %vm123, %v126, %v128
    %v130 = vsel %vm122, %v109, %v112
    %v131 = vsel %vm125, %v118, 920167782
    %v132 = vsel %vm124, %v115, %v131
    %v133 = vsel %vm123, %v130, %v132
    %v134 = vsel %vm122, %v112, %v115
    %v135 = vsel %vm125, %v121, 1326507024
    %v136 = vsel %vm124, %v118, %v135
    %v137 = vsel %vm123, %v134, %v136
    %v138 = vshll.u32 %v98, 8
    %v139 = vmul.u32.u64.compose %v138, %v137
    %v140 = vextract.low.u32 %v139
    %v141 = vextract.high.u32 %v139
    %v142 = vmul.u32.u64.compose %v138, %v133
    %v143 = vextract.low.u32 %v142
    %v144 = vextract.high.u32 %v142
    %v145 = vmul.u32 %v138, %v129
    %v146 = vadd.s32 %v141, %v143
    %vm147 = vc.u32 %v141, %v143
    %v148 = vadd.s32 %v144, 1
    %v149 = vsel %vm147, %v148, %v144
    %v150 = vadd.s32 %v145, %v149
    %v151 = vadd.s32 %v150, 536870912
    %v152 = vshrl.u32 %v151, 30
    %v153 = vshll.u32 %v152, 30
    %v154 = vsub.s32 %v150, %v153
    %vm155 = vcmp.lt.s32.totalorder %v154, 0
    %v156 = vsub.s32 0, %v154
    %v157 = vsel %vm155, %v156, %v154
    %v158 = vclz %v157
    %v159 = vsub.s32 %v158, 2
    %vm160 = vcmp.gt.s32.totalorder 0, %v159
    %v161 = vsel %vm160, 0, %v159
    %v162 = vsub.s32 32, %v161
    %v163 = vshll.u32 %v154, %v161
    %v164 = vshrl.u32 %v146, %v162
    %v165 = vor.u32 %v163, %v164
    %v166 = vsub.s32 4294967266, %v161
    %v167 = vadd.s32 %v166, 127
    %v168 = vshll.u32 %v167, 23
    %v169 = vor.u32 4788187, %v168
    %v170 = vand.u32 2147483647, %v169
    %v172 = vcvt.s32.f32 %v165
    %v173 = vmul.f32 %v172, %v170
    %v174 = vxor.u32 %v173, 2147483648
    %v175 = vsel %vm92, %v174, %v173
    %v176 = vsub.s32 4, %v152
    %v177 = vsel %vm92, %v176, %v152
    %v178 = vsel %vm91, %v89, %v175
    %v179 = vsel %vm91, 0, %v177
    %v180 = vcosq.f32.pop %v178
    %v181 = vsinq.f32.pop %v178
    %vm182 = vweird.f32 %v89
    %v183 = vadd.s32 %v179, 3
    %v184 = vand.u32 %v183, 3
    %vm185 = vcmp.lt.s32.totalorder %v184, 2
    %vm186 = vcmp.eq.s32.totalorder %v184, 0
    %v187 = vxor.u32 %v181, 2147483648
    %v188 = vsel %vm186, %v180, %v187
    %vm189 = vcmp.eq.s32.totalorder %v184, 2
    %v190 = vxor.u32 %v180, 2147483648
    %v191 = vsel %vm189, %v190, %v181
    %v192 = vsel %vm185, %v188, %v191
    %v193 = vsel %vm182, nan, %v192
    %194 = vst [vmem:[#allocation7] sm:$0xf] %v193
    // Predicated region
    $region22: #{tpu_custom_call.1} parent=1 // pred_check
      _
    $region23: #{tpu_custom_call.1} parent=1 // pred_check_branch
      %196 = sbr.rel (0) target = $region25
    $region24: #{tpu_custom_call.1} parent=1 // pred_region
      %s198 = ssub.s32 64, 64
      %199 = vsyncadd [#allocation4], %s198
      %s201 = sshll.u32 [#allocation7], 4
      %s202 = int_to_ptr.vmem [resolvable:$true] %s201
      %204 = dma.vmem_to_hbm [thread:$0]  %s202, 64, %s3, [#allocation4]
    $region25: #{tpu_custom_call.1} parent=1 // pred_fallthru
      _
    // Predicated region
    $region26: #{tpu_custom_call.1} parent=1 // pred_check
      _
    $region27: #{tpu_custom_call.1} parent=1 // pred_check_branch
      %206 = sbr.rel (0) target = $region29
    $region28: #{tpu_custom_call.1} parent=1 // pred_region
      %207 = dma.done [#allocation4], 64
    $region29: #{tpu_custom_call.1} parent=1 // pred_fallthru
      _
    %208 = vsyncpa [#allocation3], 1
    %209 = vsyncpa [#allocation6], 1
    %210 = vsyncpa [#allocation4], 1

</llo_original>
